<compile_context>
chip_gen: v6e
topology: v6e:2x2x1
jax: 0.10.0
libtpu: 0.0.40
codegen_flags: <defaults>
</compile_context>

<pallas_src>
import jax
import jax.numpy as jnp
from jax.experimental import pallas as pl
from jax.experimental.pallas import tpu as pltpu


def _fusion_kernel(
    g_ref,     # [B, D]          global feature
    loc_ref,   # [B, D, HW]      local feature, NCHW-flattened (lane-dense)
    w_ref,     # [4D + 8, D]     packed params: wg_g; wg_l; w1; w2; bg; b1; b2; pad
    out_ref,   # [B, D]          fused feature
):
    D = g_ref.shape[1]

    g = g_ref[...]                              # [B, D]
    loc = loc_ref[...]                          # [B, D, HW]  (lane-dense vregs)

    # adaptive_max_pool2d(local, 1)  -> max over spatial (lane axis, XLU)
    pooled_max = jnp.max(loc, axis=-1)          # [B, D]
    # local.view(B, D, -1).mean(2)   -> mean over spatial (lane axis, XLU)
    pooled_mean = jnp.mean(loc, axis=-1)        # [B, D]

    # Bias rows: one sublane-aligned load of the 8-row tail, then value slices.
    bias = w_ref[4 * D:4 * D + 8, :]            # [8, D]
    bg = bias[0:1, :]
    b1 = bias[1:2, :]
    b2 = bias[2:3, :]

    # gate = sigmoid([g ; pooled_max] @ Wg^T + bg), via two sublane-aligned
    # static slices of the packed weight slab (zero-cost ref views).
    gate_logits = (
        jnp.dot(g, w_ref[0:D, :], preferred_element_type=jnp.float32)
        + jnp.dot(pooled_max, w_ref[D:2 * D, :], preferred_element_type=jnp.float32)
        + bg
    )
    gate = jax.nn.sigmoid(gate_logits)          # [B, D]

    # processed_local = Linear(ReLU(Linear(pooled_mean)))
    h = jnp.dot(pooled_mean, w_ref[2 * D:3 * D, :],
                preferred_element_type=jnp.float32) + b1
    h = jnp.maximum(h, 0.0)
    processed = jnp.dot(h, w_ref[3 * D:4 * D, :],
                        preferred_element_type=jnp.float32) + b2

    # gate * g + (1 - gate) * processed  ==  processed + gate * (g - processed)
    out_ref[...] = (processed + gate * (g - processed)).astype(out_ref.dtype)


def pack_params(params):
    """Pack PyTorch-layout ([out, in]) Linear params into ONE [4D + 8, D] slab.

    Done once per model (static params), outside the per-call path.
      rows 0:D      wg[:, :D].T   (gate weight, global half)
      rows D:2D     wg[:, D:].T   (gate weight, pooled-max half)
      rows 2D:3D    w1.T
      rows 3D:4D    w2.T
      row  4D       bg
      row  4D+1     b1
      row  4D+2     b2
      rows 4D+3..   zero padding (sublane alignment)
    """
    D = params["w1"].shape[0]
    w_rows = jnp.concatenate(
        [params["wg"].T, params["w1"].T, params["w2"].T], axis=0
    ).astype(jnp.float32)                                   # [4D, D]
    b_rows = jnp.zeros((8, D), jnp.float32)
    b_rows = (
        b_rows.at[0].set(params["bg"])
        .at[1].set(params["b1"])
        .at[2].set(params["b2"])
    )
    return jnp.concatenate([w_rows, b_rows], axis=0)        # [4D + 8, D]


def gated_feature_fusion(global_feature, local_feature, w_slab):
    """global_feature: [B, D] f32; local_feature: [B, D, H, W] f32 (NCHW)."""
    B, D = global_feature.shape
    _, _, H, W = local_feature.shape
    HW = H * W

    # NCHW -> [B, D, H*W]: collapsing reshape only, no transpose / extra HBM pass.
    local_flat = local_feature.reshape(B, D, HW)

    vmem = pl.BlockSpec(memory_space=pltpu.MemorySpace.VMEM)

    # Advisory cost hint: lets XLA schedule/overlap this tiny custom call.
    cost = pl.CostEstimate(
        flops=8 * B * D * D + 2 * B * D * HW,
        transcendentals=B * D,
        bytes_accessed=B * D * HW * 4 + int(w_slab.size) * 4 + 2 * B * D * 4,
    )

    return pl.pallas_call(
        _fusion_kernel,
        out_shape=jax.ShapeDtypeStruct((B, D), jnp.float32),
        in_specs=[vmem, vmem, vmem],
        out_specs=vmem,
        cost_estimate=cost,
    )(global_feature, local_flat, w_slab)


def _reference(global_feature, local_feature, params):
    """Pure-JAX reference mirroring the PyTorch forward (4-D branch)."""
    B, D, H, W = local_feature.shape
    pooled_max = jnp.max(local_feature.reshape(B, D, H * W), axis=-1)
    pooled_mean = jnp.mean(local_feature.reshape(B, D, H * W), axis=-1)
    concat = jnp.concatenate([global_feature, pooled_max], axis=1)
    gate = jax.nn.sigmoid(concat @ params["wg"].T + params["bg"])
    h = jnp.maximum(pooled_mean @ params["w1"].T + params["b1"], 0.0)
    processed = h @ params["w2"].T + params["b2"]
    return gate * global_feature + (1.0 - gate) * processed


if __name__ == "__main__":
    B, D, H, W = 2, 32, 16, 16

    key = jax.random.PRNGKey(0)
    k_g, k_l, k_wg, k_bg, k_w1, k_b1, k_w2, k_b2 = jax.random.split(key, 8)

    global_feature = jax.random.normal(k_g, (B, D), dtype=jnp.float32)
    local_feature = jax.random.normal(k_l, (B, D, H, W), dtype=jnp.float32)

    # Deterministic parameter init (PyTorch Linear weight shape = [out, in]).
    scale = 0.1
    params = {
        "wg": scale * jax.random.normal(k_wg, (D, 2 * D), dtype=jnp.float32),
        "bg": scale * jax.random.normal(k_bg, (D,), dtype=jnp.float32),
        "w1": scale * jax.random.normal(k_w1, (D, D), dtype=jnp.float32),
        "b1": scale * jax.random.normal(k_b1, (D,), dtype=jnp.float32),
        "w2": scale * jax.random.normal(k_w2, (D, D), dtype=jnp.float32),
        "b2": scale * jax.random.normal(k_b2, (D,), dtype=jnp.float32),
    }

    # Pack/transposed weights + biases once (static per model), outside the call path.
    w_slab = pack_params(params)

    out = gated_feature_fusion(global_feature, local_feature, w_slab)
    out = jax.block_until_ready(out)

    ref = _reference(global_feature, local_feature, params)
    assert out.shape == (B, D)
    assert jnp.allclose(out, ref, atol=1e-5, rtol=1e-5), "mismatch vs reference"

    print("KERNEL_OK")
</pallas_src>

<mosaic_0001>
module attributes {stable_mosaic.version = 11 : i64} {
  func.func @_fusion_kernel(%arg0: memref<2x32xf32, #tpu.memory_space<vmem>>, %arg1: memref<2x32x256xf32, #tpu.memory_space<vmem>>, %arg2: memref<136x32xf32, #tpu.memory_space<vmem>>, %arg3: memref<2x32xf32, #tpu.memory_space<vmem>>) attributes {dimension_semantics = [], scalar_prefetch = 0 : i64, scratch_operands = 0 : i64, tpu.core_type = #tpu.core_type<tc>} {
    %c0 = arith.constant 0 : index
    %c0_0 = arith.constant 0 : index
    %0 = vector.load %arg0[%c0, %c0_0] : memref<2x32xf32, #tpu.memory_space<vmem>>, vector<2x32xf32>
    %c0_1 = arith.constant 0 : index
    %c0_2 = arith.constant 0 : index
    %c0_3 = arith.constant 0 : index
    %1 = vector.load %arg1[%c0_1, %c0_2, %c0_3] : memref<2x32x256xf32, #tpu.memory_space<vmem>>, vector<2x32x256xf32>
    %cst = arith.constant dense<0xFF800000> : vector<2x32xf32>
    %2 = vector.multi_reduction <maximumf>, %1, %cst [2] : vector<2x32x256xf32> to vector<2x32xf32>
    %cst_4 = arith.constant dense<0.000000e+00> : vector<2x32xf32>
    %3 = vector.multi_reduction <add>, %1, %cst_4 [2] : vector<2x32x256xf32> to vector<2x32xf32>
    %cst_5 = arith.constant 2.560000e+02 : f32
    %4 = vector.broadcast %cst_5 : f32 to vector<2x32xf32>
    %5 = arith.divf %3, %4 : vector<2x32xf32>
    %c128 = arith.constant 128 : index
    %c0_6 = arith.constant 0 : index
    %6 = vector.load %arg2[%c128, %c0_6] : memref<136x32xf32, #tpu.memory_space<vmem>>, vector<8x32xf32>
    %7 = vector.extract_strided_slice %6 {offsets = [0, 0], sizes = [1, 32], strides = [1, 1]} : vector<8x32xf32> to vector<1x32xf32>
    %8 = vector.extract_strided_slice %6 {offsets = [1, 0], sizes = [1, 32], strides = [1, 1]} : vector<8x32xf32> to vector<1x32xf32>
    %9 = vector.extract_strided_slice %6 {offsets = [2, 0], sizes = [1, 32], strides = [1, 1]} : vector<8x32xf32> to vector<1x32xf32>
    %c0_7 = arith.constant 0 : index
    %c0_8 = arith.constant 0 : index
    %10 = vector.load %arg2[%c0_7, %c0_8] : memref<136x32xf32, #tpu.memory_space<vmem>>, vector<32x32xf32>
    %cst_9 = arith.constant dense<0.000000e+00> : vector<2x32xf32>
    %11 = tpu.matmul %0, %10, %cst_9 {dimension_numbers = #tpu.dot_dimension_numbers<[1], [0], [0], [1], [0, 0, 1, 1], [], []>} : vector<2x32xf32>, vector<32x32xf32>, vector<2x32xf32> -> vector<2x32xf32>
    %c32 = arith.constant 32 : index
    %c0_10 = arith.constant 0 : index
    %12 = vector.load %arg2[%c32, %c0_10] : memref<136x32xf32, #tpu.memory_space<vmem>>, vector<32x32xf32>
    %cst_11 = arith.constant dense<0.000000e+00> : vector<2x32xf32>
    %13 = tpu.matmul %2, %12, %cst_11 {dimension_numbers = #tpu.dot_dimension_numbers<[1], [0], [0], [1], [0, 0, 1, 1], [], []>} : vector<2x32xf32>, vector<32x32xf32>, vector<2x32xf32> -> vector<2x32xf32>
    %14 = arith.addf %11, %13 : vector<2x32xf32>
    %15 = vector.broadcast %7 : vector<1x32xf32> to vector<2x32xf32>
    %16 = arith.addf %14, %15 : vector<2x32xf32>
    %17 = arith.negf %16 : vector<2x32xf32>
    %18 = math.exp %17 : vector<2x32xf32>
    %cst_12 = arith.constant 1.000000e+00 : f32
    %19 = vector.broadcast %cst_12 : f32 to vector<2x32xf32>
    %20 = arith.addf %19, %18 : vector<2x32xf32>
    %21 = arith.divf %19, %20 : vector<2x32xf32>
    %c64 = arith.constant 64 : index
    %c0_13 = arith.constant 0 : index
    %22 = vector.load %arg2[%c64, %c0_13] : memref<136x32xf32, #tpu.memory_space<vmem>>, vector<32x32xf32>
    %cst_14 = arith.constant dense<0.000000e+00> : vector<2x32xf32>
    %23 = tpu.matmul %5, %22, %cst_14 {dimension_numbers = #tpu.dot_dimension_numbers<[1], [0], [0], [1], [0, 0, 1, 1], [], []>} : vector<2x32xf32>, vector<32x32xf32>, vector<2x32xf32> -> vector<2x32xf32>
    %24 = vector.broadcast %8 : vector<1x32xf32> to vector<2x32xf32>
    %25 = arith.addf %23, %24 : vector<2x32xf32>
    %cst_15 = arith.constant 0.000000e+00 : f32
    %26 = vector.broadcast %cst_15 : f32 to vector<2x32xf32>
    %27 = arith.maximumf %25, %26 : vector<2x32xf32>
    %c96 = arith.constant 96 : index
    %c0_16 = arith.constant 0 : index
    %28 = vector.load %arg2[%c96, %c0_16] : memref<136x32xf32, #tpu.memory_space<vmem>>, vector<32x32xf32>
    %cst_17 = arith.constant dense<0.000000e+00> : vector<2x32xf32>
    %29 = tpu.matmul %27, %28, %cst_17 {dimension_numbers = #tpu.dot_dimension_numbers<[1], [0], [0], [1], [0, 0, 1, 1], [], []>} : vector<2x32xf32>, vector<32x32xf32>, vector<2x32xf32> -> vector<2x32xf32>
    %30 = vector.broadcast %9 : vector<1x32xf32> to vector<2x32xf32>
    %31 = arith.addf %29, %30 : vector<2x32xf32>
    %32 = arith.subf %0, %31 : vector<2x32xf32>
    %33 = arith.mulf %21, %32 : vector<2x32xf32>
    %34 = arith.addf %31, %33 : vector<2x32xf32>
    %c0_18 = arith.constant 0 : index
    %c0_19 = arith.constant 0 : index
    %35 = vector.load %arg3[%c0_18, %c0_19] : memref<2x32xf32, #tpu.memory_space<vmem>>, vector<2x32xf32>
    tpu.vector_store %arg3[%c0_18, %c0_19], %34 {strides = array<i32>} : memref<2x32xf32, #tpu.memory_space<vmem>>, vector<2x32xf32>,
    return
  }
}

</mosaic_0001>

<llo_original>
// kernel: tpu_custom_call.1
$region0: #{tpu_custom_call.1}
  #allocation0 [shape = 'u32[]', space=smem, size = 0x4, offset = 0x4, fixed_abs, tag = 'smem constant byte address 0x4 - core index']
  #allocation1 [shape = 'u32[144,128]{1,0:T(1,128)}', space=vmem, size = 0x12000, scoped, tag = 'internal scratch']
  %s0 = inlined_call_operand.vmem [shape: f32[2,32], index: 0, kind: input, shape index: {}]
  %s1 = inlined_call_operand.vmem [shape: f32[2,32,256], index: 1, kind: input, shape index: {}]
  %s2 = inlined_call_operand.vmem [shape: f32[136,32], index: 2, kind: input, shape index: {}]
  %s3 = inlined_call_operand.hbm [shape: f32[2,32], index: 3, kind: output, shape index: {}]
  %s4 = sld [smem:[#allocation0]]
  $region22: #{tpu_custom_call.1} parent=0
    _
  %s6 = ssub.s32 1, %s4
  %s7 = scalar_select 0, %s6, %s4
  $region1: #{tpu_custom_call.1} parent=0
    #allocation2 [shape = 'u8[1024]{0}', space=vmem, size = 0x400, scoped, tag = 'output window, operand 0, single buffered']
    #allocation3 [shape = 's32[1]{0}', space=sflag, size = 0x4, scoped, tag = 'scoped memory for tpu_custom_call.1']
    %8 = vsyncpa [#allocation3], 0
    // Predicated region
    $region2: #{tpu_custom_call.1} parent=1 // pred_check
      _
    $region3: #{tpu_custom_call.1} parent=1 // pred_check_branch
      %10 = sbr.rel (0) target = $region5
    $region4: #{tpu_custom_call.1} parent=1 // pred_region
      _
    $region5: #{tpu_custom_call.1} parent=1 // pred_fallthru
      _
    // Predicated region
    $region6: #{tpu_custom_call.1} parent=1 // pred_check
      _
    $region7: #{tpu_custom_call.1} parent=1 // pred_check_branch
      %12 = sbr.rel (0) target = $region9
    $region8: #{tpu_custom_call.1} parent=1 // pred_region
      _
    $region9: #{tpu_custom_call.1} parent=1 // pred_fallthru
      _
    // Predicated region
    $region10: #{tpu_custom_call.1} parent=1 // pred_check
      _
    $region11: #{tpu_custom_call.1} parent=1 // pred_check_branch
      %14 = sbr.rel (0) target = $region13
    $region12: #{tpu_custom_call.1} parent=1 // pred_region
      _
    $region13: #{tpu_custom_call.1} parent=1 // pred_fallthru
      _
    %v15 = vld [vmem:[%s0] sm:$0x3]
    %v16 = vld [vmem:[%s1] sm:$0xff]
    %v17 = vld [vmem:[%s1 + $0x8] sm:$0xff]
    %v18 = vld [vmem:[%s1 + $0x10] sm:$0xff]
    %v19 = vld [vmem:[%s1 + $0x18] sm:$0xff]
    %v20 = vld [vmem:[%s1 + $0x20] sm:$0xff]
    %v21 = vld [vmem:[%s1 + $0x28] sm:$0xff]
    %v22 = vld [vmem:[%s1 + $0x30] sm:$0xff]
    %v23 = vld [vmem:[%s1 + $0x38] sm:$0xff]
    %v24 = vld [vmem:[%s1 + $0x40] sm:$0xff]
    %v25 = vld [vmem:[%s1 + $0x48] sm:$0xff]
    %v26 = vld [vmem:[%s1 + $0x50] sm:$0xff]
    %v27 = vld [vmem:[%s1 + $0x58] sm:$0xff]
    %v28 = vld [vmem:[%s1 + $0x60] sm:$0xff]
    %v29 = vld [vmem:[%s1 + $0x68] sm:$0xff]
    %v30 = vld [vmem:[%s1 + $0x70] sm:$0xff]
    %v31 = vld [vmem:[%s1 + $0x78] sm:$0xff]
    %v32 = vmax.f32 %v16, %v17
    %33 = vmax.xlane.f32.xlu0 %v32
    %v34 = vpop.xlane.xlu0 %33
    %v35 = vmax.f32 %v18, %v19
    %36 = vmax.xlane.f32.xlu0 %v35
    %v37 = vpop.xlane.xlu0 %36
    %v38 = vmax.f32 %v20, %v21
    %39 = vmax.xlane.f32.xlu0 %v38
    %v40 = vpop.xlane.xlu0 %39
    %v41 = vmax.f32 %v22, %v23
    %42 = vmax.xlane.f32.xlu0 %v41
    %v43 = vpop.xlane.xlu0 %42
    %v44 = vmax.f32 %v24, %v25
    %45 = vmax.xlane.f32.xlu0 %v44
    %v46 = vpop.xlane.xlu0 %45
    %v47 = vmax.f32 %v26, %v27
    %48 = vmax.xlane.f32.xlu0 %v47
    %v49 = vpop.xlane.xlu0 %48
    %v50 = vmax.f32 %v28, %v29
    %51 = vmax.xlane.f32.xlu0 %v50
    %v52 = vpop.xlane.xlu0 %51
    %v53 = vmax.f32 %v30, %v31
    %54 = vmax.xlane.f32.xlu0 %v53
    %v55 = vpop.xlane.xlu0 %54
    %v56 = vadd.f32 %v16, %v17
    %57 = vadd.xlane.f32.xlu0 %v56
    %v58 = vpop.xlane.xlu0 %57
    %v59 = vadd.f32 %v18, %v19
    %60 = vadd.xlane.f32.xlu0 %v59
    %v61 = vpop.xlane.xlu0 %60
    %v62 = vadd.f32 %v20, %v21
    %63 = vadd.xlane.f32.xlu0 %v62
    %v64 = vpop.xlane.xlu0 %63
    %v65 = vadd.f32 %v22, %v23
    %66 = vadd.xlane.f32.xlu0 %v65
    %v67 = vpop.xlane.xlu0 %66
    %v68 = vadd.f32 %v24, %v25
    %69 = vadd.xlane.f32.xlu0 %v68
    %v70 = vpop.xlane.xlu0 %69
    %v71 = vadd.f32 %v26, %v27
    %72 = vadd.xlane.f32.xlu0 %v71
    %v73 = vpop.xlane.xlu0 %72
    %v74 = vadd.f32 %v28, %v29
    %75 = vadd.xlane.f32.xlu0 %v74
    %v76 = vpop.xlane.xlu0 %75
    %v77 = vadd.f32 %v30, %v31
    %78 = vadd.xlane.f32.xlu0 %v77
    %v79 = vpop.xlane.xlu0 %78
    %v80 = vrcp.pop 256.0
    %v81 = vmul.f32 %v58, %v80
    %v82 = vmul.f32 %v61, %v80
    %v83 = vmul.f32 %v64, %v80
    %v84 = vmul.f32 %v67, %v80
    %v85 = vmul.f32 %v70, %v80
    %v86 = vmul.f32 %v73, %v80
    %v87 = vmul.f32 %v76, %v80
    %v88 = vmul.f32 %v79, %v80
    %v89 = vld [vmem:[%s2 + $0x80] sm:$0xff]
    %v90 = vld [vmem:[%s2] sm:$0xff]
    %v91 = vld [vmem:[%s2 + $0x8] sm:$0xff]
    %v92 = vld [vmem:[%s2 + $0x10] sm:$0xff]
    %v93 = vld [vmem:[%s2 + $0x18] sm:$0xff]
    %v94 = vld [vmem:[%s2 + $0x20] sm:$0xff]
    %v95 = vld [vmem:[%s2 + $0x28] sm:$0xff]
    %v96 = vld [vmem:[%s2 + $0x30] sm:$0xff]
    %v97 = vld [vmem:[%s2 + $0x38] sm:$0xff]
    %v106 = vlaneseq
    %v107 = vand.u32 %v106, 127
    %v108 = vlaneseq
    %v109 = vshrl.u32 %v108, 7
    %v110 = vsub.s32 %v107, %v109
    %v111 = vrot.slane %v34, %v110
    %v112 = vadd.s32 %v107, 4294967288
    %v113 = vlaneseq
    %v114 = vshrl.u32 %v113, 7
    %v115 = vsub.s32 %v112, %v114
    %v116 = vrot.slane %v37, %v115
    %vm117 = vcmask 130112
    %v118 = vsel %vm117, %v116, %v111
    %v119 = vadd.s32 %v107, 4294967280
    %v120 = vlaneseq
    %v121 = vshrl.u32 %v120, 7
    %v122 = vsub.s32 %v119, %v121
    %v123 = vrot.slane %v40, %v122
    %vm124 = vcmask 195712
    %v125 = vsel %vm124, %v123, %v118
    %v126 = vadd.s32 %v107, 4294967272
    %v127 = vlaneseq
    %v128 = vshrl.u32 %v127, 7
    %v129 = vsub.s32 %v126, %v128
    %v130 = vrot.slane %v43, %v129
    %vm131 = vcmask 261312
    %v132 = vsel %vm131, %v130, %v125
    %v133 = vlaneseq
    %v134 = vshrl.u32 %v133, 7
    %v135 = vsub.s32 %v107, %v134
    %v136 = vrot.slane %v46, %v135
    %v137 = vlaneseq
    %v138 = vshrl.u32 %v137, 7
    %v139 = vsub.s32 %v112, %v138
    %v140 = vrot.slane %v49, %v139
    %v141 = vsel %vm117, %v140, %v136
    %v142 = vlaneseq
    %v143 = vshrl.u32 %v142, 7
    %v144 = vsub.s32 %v119, %v143
    %v145 = vrot.slane %v52, %v144
    %v146 = vsel %vm124, %v145, %v141
    %v147 = vlaneseq
    %v148 = vshrl.u32 %v147, 7
    %v149 = vsub.s32 %v126, %v148
    %v150 = vrot.slane %v55, %v149
    %v151 = vsel %vm131, %v150, %v146
    %vm152 = vcmask 1041409
    %v153 = vsel %vm152, %v151, %v132
    %vm154 = vcmask 261120
    %v155 = vsel %vm154, %v153, 0
    %157 = vmatprep.subr.mxu0 0.0
    %158 = vmatpush1.msra.mxu0 0.0
    %159 = vmatprep.subr.mxu0 0.0
    %160 = vmatpush1.msra.mxu0 0.0
    %161 = vmatprep.subr.mxu0 0.0
    %162 = vmatpush1.msra.mxu0 0.0
    %163 = vmatprep.subr.mxu0 0.0
    %164 = vmatpush1.msra.mxu0 0.0
    %165 = vmatprep.subr.mxu0 0.0
    %166 = vmatpush1.msra.mxu0 0.0
    %167 = vmatprep.subr.mxu0 0.0
    %168 = vmatpush1.msra.mxu0 0.0
    %169 = vmatprep.subr.mxu0 0.0
    %170 = vmatpush1.msra.mxu0 0.0
    %171 = vmatprep.subr.mxu0 0.0
    %172 = vmatpush1.msra.mxu0 0.0
    %173 = vmatprep.subr.mxu0 0.0
    %174 = vmatpush1.msra.mxu0 0.0
    %175 = vmatprep.subr.mxu0 0.0
    %176 = vmatpush1.msra.mxu0 0.0
    %177 = vmatprep.subr.mxu0 0.0
    %178 = vmatpush1.msra.mxu0 0.0
    %179 = vmatprep.subr.mxu0 0.0
    %180 = vmatpush1.msra.mxu0 0.0
    %181 = vmatprep.subr.mxu0 0.0
    %182 = vmatpush1.msra.mxu0 %v97
    %183 = vmatprep.subr.mxu0 0.0
    %184 = vmatpush1.msra.mxu0 %v96
    %185 = vmatprep.subr.mxu0 0.0
    %186 = vmatpush1.msra.mxu0 %v95
    %187 = vmatprep.subr.mxu0 0.0
    %188 = vmatpush1.msra.mxu0 %v94
    %189 = vmatprep.subr.mxu0 0.0
    %190 = vmatpush2.msra.mxu0 0.0
    %191 = vmatprep.subr.mxu0 0.0
    %192 = vmatpush2.msra.mxu0 0.0
    %193 = vmatprep.subr.mxu0 0.0
    %194 = vmatpush2.msra.mxu0 0.0
    %195 = vmatprep.subr.mxu0 0.0
    %196 = vmatpush2.msra.mxu0 0.0
    %197 = vmatprep.subr.mxu0 0.0
    %198 = vmatpush2.msra.mxu0 0.0
    %199 = vmatprep.subr.mxu0 0.0
    %200 = vmatpush2.msra.mxu0 0.0
    %201 = vmatprep.subr.mxu0 0.0
    %202 = vmatpush2.msra.mxu0 0.0
    %203 = vmatprep.subr.mxu0 0.0
    %204 = vmatpush2.msra.mxu0 0.0
    %205 = vmatprep.subr.mxu0 0.0
    %206 = vmatpush2.msra.mxu0 0.0
    %207 = vmatprep.subr.mxu0 0.0
    %208 = vmatpush2.msra.mxu0 0.0
    %209 = vmatprep.subr.mxu0 0.0
    %210 = vmatpush2.msra.mxu0 0.0
    %211 = vmatprep.subr.mxu0 0.0
    %212 = vmatpush2.msra.mxu0 0.0
    %213 = vmatprep.subr.mxu0 0.0
    %214 = vmatpush2.msra.mxu0 0.0
    %215 = vmatprep.subr.mxu0 0.0
    %216 = vmatpush2.msra.mxu0 0.0
    %217 = vmatprep.subr.mxu0 0.0
    %218 = vmatpush2.msra.mxu0 0.0
    %219 = vmatprep.subr.mxu0 0.0
    %220 = vmatpush2.msra.mxu0 0.0
    %221 = vmatprep.mubr.f32.mxu0 0.0
    %222 = vmatmul.mubr.f32.gmra.mxu0 %v155
    %v223 = vpop.f32.mrf.mxu0
    %v224 = vadd.f32 0.0, %v223
    %v225 = vpop.f32.mrf.mxu0
    %226 = vdwg.mxu0
    %v228 = vsel %vm154, %v15, 0
    %230 = vmatprep.subr.mxu0 0.0
    %231 = vmatpush1.msra.mxu0 0.0
    %232 = vmatprep.subr.mxu0 0.0
    %233 = vmatpush1.msra.mxu0 0.0
    %234 = vmatprep.subr.mxu0 0.0
    %235 = vmatpush1.msra.mxu0 0.0
    %236 = vmatprep.subr.mxu0 0.0
    %237 = vmatpush1.msra.mxu0 0.0
    %238 = vmatprep.subr.mxu0 0.0
    %239 = vmatpush1.msra.mxu0 0.0
    %240 = vmatprep.subr.mxu0 0.0
    %241 = vmatpush1.msra.mxu0 0.0
    %242 = vmatprep.subr.mxu0 0.0
    %243 = vmatpush1.msra.mxu0 0.0
    %244 = vmatprep.subr.mxu0 0.0
    %245 = vmatpush1.msra.mxu0 0.0
    %246 = vmatprep.subr.mxu0 0.0
    %247 = vmatpush1.msra.mxu0 0.0
    %248 = vmatprep.subr.mxu0 0.0
    %249 = vmatpush1.msra.mxu0 0.0
    %250 = vmatprep.subr.mxu0 0.0
    %251 = vmatpush1.msra.mxu0 0.0
    %252 = vmatprep.subr.mxu0 0.0
    %253 = vmatpush1.msra.mxu0 0.0
    %254 = vmatprep.subr.mxu0 0.0
    %255 = vmatpush1.msra.mxu0 %v93
    %256 = vmatprep.subr.mxu0 0.0
    %257 = vmatpush1.msra.mxu0 %v92
    %258 = vmatprep.subr.mxu0 0.0
    %259 = vmatpush1.msra.mxu0 %v91
    %260 = vmatprep.subr.mxu0 0.0
    %261 = vmatpush1.msra.mxu0 %v90
    %262 = vmatprep.subr.mxu0 0.0
    %263 = vmatpush2.msra.mxu0 0.0
    %264 = vmatprep.subr.mxu0 0.0
    %265 = vmatpush2.msra.mxu0 0.0
    %266 = vmatprep.subr.mxu0 0.0
    %267 = vmatpush2.msra.mxu0 0.0
    %268 = vmatprep.subr.mxu0 0.0
    %269 = vmatpush2.msra.mxu0 0.0
    %270 = vmatprep.subr.mxu0 0.0
    %271 = vmatpush2.msra.mxu0 0.0
    %272 = vmatprep.subr.mxu0 0.0
    %273 = vmatpush2.msra.mxu0 0.0
    %274 = vmatprep.subr.mxu0 0.0
    %275 = vmatpush2.msra.mxu0 0.0
    %276 = vmatprep.subr.mxu0 0.0
    %277 = vmatpush2.msra.mxu0 0.0
    %278 = vmatprep.subr.mxu0 0.0
    %279 = vmatpush2.msra.mxu0 0.0
    %280 = vmatprep.subr.mxu0 0.0
    %281 = vmatpush2.msra.mxu0 0.0
    %282 = vmatprep.subr.mxu0 0.0
    %283 = vmatpush2.msra.mxu0 0.0
    %284 = vmatprep.subr.mxu0 0.0
    %285 = vmatpush2.msra.mxu0 0.0
    %286 = vmatprep.subr.mxu0 0.0
    %287 = vmatpush2.msra.mxu0 0.0
    %288 = vmatprep.subr.mxu0 0.0
    %289 = vmatpush2.msra.mxu0 0.0
    %290 = vmatprep.subr.mxu0 0.0
    %291 = vmatpush2.msra.mxu0 0.0
    %292 = vmatprep.subr.mxu0 0.0
    %293 = vmatpush2.msra.mxu0 0.0
    %294 = vmatprep.mubr.f32.mxu0 0.0
    %295 = vmatmul.mubr.f32.gmra.mxu0 %v228
    %v296 = vpop.f32.mrf.mxu0
    %v297 = vadd.f32 %v224, %v296
    %v298 = vpop.f32.mrf.mxu0
    %299 = vdwg.mxu0
    %v300 = vlaneseq
    %v301 = vshrl.u32 %v300, 7
    %v302 = vsub.s32 0, %v301
    %v303 = vrot.slane %v89, %v302
    %v304 = vadd.f32 %v297, %v303
    %v305 = vxor.u32 %v304, 2147483648
    %v306 = vmul.f32 %v305, 1.442695
    %v307 = vpow.pop %v306
    %v308 = vadd.f32 %v307, 1.0
    %v309 = vrcp.pop %v308
    %v310 = vmul.f32 1.0, %v309
    %v311 = vld [vmem:[%s2 + $0x40] sm:$0xff]
    %v312 = vld [vmem:[%s2 + $0x48] sm:$0xff]
    %v313 = vld [vmem:[%s2 + $0x50] sm:$0xff]
    %v314 = vld [vmem:[%s2 + $0x58] sm:$0xff]
    %v315 = vlaneseq
    %v316 = vshrl.u32 %v315, 7
    %v317 = vsub.s32 1, %v316
    %v318 = vrot.slane %v89, %v317
    %v327 = vlaneseq
    %v328 = vshrl.u32 %v327, 7
    %v329 = vsub.s32 %v107, %v328
    %v330 = vrot.slane %v81, %v329
    %v331 = vlaneseq
    %v332 = vshrl.u32 %v331, 7
    %v333 = vsub.s32 %v112, %v332
    %v334 = vrot.slane %v82, %v333
    %v335 = vsel %vm117, %v334, %v330
    %v336 = vlaneseq
    %v337 = vshrl.u32 %v336, 7
    %v338 = vsub.s32 %v119, %v337
    %v339 = vrot.slane %v83, %v338
    %v340 = vsel %vm124, %v339, %v335
    %v341 = vlaneseq
    %v342 = vshrl.u32 %v341, 7
    %v343 = vsub.s32 %v126, %v342
    %v344 = vrot.slane %v84, %v343
    %v345 = vsel %vm131, %v344, %v340
    %v346 = vlaneseq
    %v347 = vshrl.u32 %v346, 7
    %v348 = vsub.s32 %v107, %v347
    %v349 = vrot.slane %v85, %v348
    %v350 = vlaneseq
    %v351 = vshrl.u32 %v350, 7
    %v352 = vsub.s32 %v112, %v351
    %v353 = vrot.slane %v86, %v352
    %v354 = vsel %vm117, %v353, %v349
    %v355 = vlaneseq
    %v356 = vshrl.u32 %v355, 7
    %v357 = vsub.s32 %v119, %v356
    %v358 = vrot.slane %v87, %v357
    %v359 = vsel %vm124, %v358, %v354
    %v360 = vlaneseq
    %v361 = vshrl.u32 %v360, 7
    %v362 = vsub.s32 %v126, %v361
    %v363 = vrot.slane %v88, %v362
    %v364 = vsel %vm131, %v363, %v359
    %v365 = vsel %vm152, %v364, %v345
    %v366 = vsel %vm154, %v365, 0
    %368 = vmatprep.subr.mxu0 0.0
    %369 = vmatpush1.msra.mxu0 0.0
    %370 = vmatprep.subr.mxu0 0.0
    %371 = vmatpush1.msra.mxu0 0.0
    %372 = vmatprep.subr.mxu0 0.0
    %373 = vmatpush1.msra.mxu0 0.0
    %374 = vmatprep.subr.mxu0 0.0
    %375 = vmatpush1.msra.mxu0 0.0
    %376 = vmatprep.subr.mxu0 0.0
    %377 = vmatpush1.msra.mxu0 0.0
    %378 = vmatprep.subr.mxu0 0.0
    %379 = vmatpush1.msra.mxu0 0.0
    %380 = vmatprep.subr.mxu0 0.0
    %381 = vmatpush1.msra.mxu0 0.0
    %382 = vmatprep.subr.mxu0 0.0
    %383 = vmatpush1.msra.mxu0 0.0
    %384 = vmatprep.subr.mxu0 0.0
    %385 = vmatpush1.msra.mxu0 0.0
    %386 = vmatprep.subr.mxu0 0.0
    %387 = vmatpush1.msra.mxu0 0.0
    %388 = vmatprep.subr.mxu0 0.0
    %389 = vmatpush1.msra.mxu0 0.0
    %390 = vmatprep.subr.mxu0 0.0
    %391 = vmatpush1.msra.mxu0 0.0
    %392 = vmatprep.subr.mxu0 0.0
    %393 = vmatpush1.msra.mxu0 %v314
    %394 = vmatprep.subr.mxu0 0.0
    %395 = vmatpush1.msra.mxu0 %v313
    %396 = vmatprep.subr.mxu0 0.0
    %397 = vmatpush1.msra.mxu0 %v312
    %398 = vmatprep.subr.mxu0 0.0
    %399 = vmatpush1.msra.mxu0 %v311
    %400 = vmatprep.subr.mxu0 0.0
    %401 = vmatpush2.msra.mxu0 0.0
    %402 = vmatprep.subr.mxu0 0.0
    %403 = vmatpush2.msra.mxu0 0.0
    %404 = vmatprep.subr.mxu0 0.0
    %405 = vmatpush2.msra.mxu0 0.0
    %406 = vmatprep.subr.mxu0 0.0
    %407 = vmatpush2.msra.mxu0 0.0
    %408 = vmatprep.subr.mxu0 0.0
    %409 = vmatpush2.msra.mxu0 0.0
    %410 = vmatprep.subr.mxu0 0.0
    %411 = vmatpush2.msra.mxu0 0.0
    %412 = vmatprep.subr.mxu0 0.0
    %413 = vmatpush2.msra.mxu0 0.0
    %414 = vmatprep.subr.mxu0 0.0
    %415 = vmatpush2.msra.mxu0 0.0
    %416 = vmatprep.subr.mxu0 0.0
    %417 = vmatpush2.msra.mxu0 0.0
    %418 = vmatprep.subr.mxu0 0.0
    %419 = vmatpush2.msra.mxu0 0.0
    %420 = vmatprep.subr.mxu0 0.0
    %421 = vmatpush2.msra.mxu0 0.0
    %422 = vmatprep.subr.mxu0 0.0
    %423 = vmatpush2.msra.mxu0 0.0
    %424 = vmatprep.subr.mxu0 0.0
    %425 = vmatpush2.msra.mxu0 0.0
    %426 = vmatprep.subr.mxu0 0.0
    %427 = vmatpush2.msra.mxu0 0.0
    %428 = vmatprep.subr.mxu0 0.0
    %429 = vmatpush2.msra.mxu0 0.0
    %430 = vmatprep.subr.mxu0 0.0
    %431 = vmatpush2.msra.mxu0 0.0
    %432 = vmatprep.mubr.f32.mxu0 0.0
    %433 = vmatmul.mubr.f32.gmra.mxu0 %v366
    %v434 = vpop.f32.mrf.mxu0
    %v435 = vadd.f32 %v318, %v434
    %v436 = vpop.f32.mrf.mxu0
    %437 = vdwg.mxu0
    %v438 = vmax.f32 %v435, 0.0
    %v439 = vld [vmem:[%s2 + $0x60] sm:$0xff]
    %v440 = vld [vmem:[%s2 + $0x68] sm:$0xff]
    %v441 = vld [vmem:[%s2 + $0x70] sm:$0xff]
    %v442 = vld [vmem:[%s2 + $0x78] sm:$0xff]
    %v443 = vlaneseq
    %v444 = vshrl.u32 %v443, 7
    %v445 = vsub.s32 2, %v444
    %v446 = vrot.slane %v89, %v445
    %v448 = vsel %vm154, %v438, 0
    %450 = vmatprep.subr.mxu0 0.0
    %451 = vmatpush1.msra.mxu0 0.0
    %452 = vmatprep.subr.mxu0 0.0
    %453 = vmatpush1.msra.mxu0 0.0
    %454 = vmatprep.subr.mxu0 0.0
    %455 = vmatpush1.msra.mxu0 0.0
    %456 = vmatprep.subr.mxu0 0.0
    %457 = vmatpush1.msra.mxu0 0.0
    %458 = vmatprep.subr.mxu0 0.0
    %459 = vmatpush1.msra.mxu0 0.0
    %460 = vmatprep.subr.mxu0 0.0
    %461 = vmatpush1.msra.mxu0 0.0
    %462 = vmatprep.subr.mxu0 0.0
    %463 = vmatpush1.msra.mxu0 0.0
    %464 = vmatprep.subr.mxu0 0.0
    %465 = vmatpush1.msra.mxu0 0.0
    %466 = vmatprep.subr.mxu0 0.0
    %467 = vmatpush1.msra.mxu0 0.0
    %468 = vmatprep.subr.mxu0 0.0
    %469 = vmatpush1.msra.mxu0 0.0
    %470 = vmatprep.subr.mxu0 0.0
    %471 = vmatpush1.msra.mxu0 0.0
    %472 = vmatprep.subr.mxu0 0.0
    %473 = vmatpush1.msra.mxu0 0.0
    %474 = vmatprep.subr.mxu0 0.0
    %475 = vmatpush1.msra.mxu0 %v442
    %476 = vmatprep.subr.mxu0 0.0
    %477 = vmatpush1.msra.mxu0 %v441
    %478 = vmatprep.subr.mxu0 0.0
    %479 = vmatpush1.msra.mxu0 %v440
    %480 = vmatprep.subr.mxu0 0.0
    %481 = vmatpush1.msra.mxu0 %v439
    %482 = vmatprep.subr.mxu0 0.0
    %483 = vmatpush2.msra.mxu0 0.0
    %484 = vmatprep.subr.mxu0 0.0
    %485 = vmatpush2.msra.mxu0 0.0
    %486 = vmatprep.subr.mxu0 0.0
    %487 = vmatpush2.msra.mxu0 0.0
    %488 = vmatprep.subr.mxu0 0.0
    %489 = vmatpush2.msra.mxu0 0.0
    %490 = vmatprep.subr.mxu0 0.0
    %491 = vmatpush2.msra.mxu0 0.0
    %492 = vmatprep.subr.mxu0 0.0
    %493 = vmatpush2.msra.mxu0 0.0
    %494 = vmatprep.subr.mxu0 0.0
    %495 = vmatpush2.msra.mxu0 0.0
    %496 = vmatprep.subr.mxu0 0.0
    %497 = vmatpush2.msra.mxu0 0.0
    %498 = vmatprep.subr.mxu0 0.0
    %499 = vmatpush2.msra.mxu0 0.0
    %500 = vmatprep.subr.mxu0 0.0
    %501 = vmatpush2.msra.mxu0 0.0
    %502 = vmatprep.subr.mxu0 0.0
    %503 = vmatpush2.msra.mxu0 0.0
    %504 = vmatprep.subr.mxu0 0.0
    %505 = vmatpush2.msra.mxu0 0.0
    %506 = vmatprep.subr.mxu0 0.0
    %507 = vmatpush2.msra.mxu0 0.0
    %508 = vmatprep.subr.mxu0 0.0
    %509 = vmatpush2.msra.mxu0 0.0
    %510 = vmatprep.subr.mxu0 0.0
    %511 = vmatpush2.msra.mxu0 0.0
    %512 = vmatprep.subr.mxu0 0.0
    %513 = vmatpush2.msra.mxu0 0.0
    %514 = vmatprep.mubr.f32.mxu0 0.0
    %515 = vmatmul.mubr.f32.gmra.mxu0 %v448
    %v516 = vpop.f32.mrf.mxu0
    %v517 = vadd.f32 %v446, %v516
    %v518 = vpop.f32.mrf.mxu0
    %519 = vdwg.mxu0
    %v520 = vsub.f32 %v15, %v517
    %v521 = vmul.f32 %v310, %v520
    %v522 = vadd.f32 %v517, %v521
    %vm523 = vcmask 254976
    %524 = vst.msk [vmem:[#allocation2] sm:$0x3] %vm523, %v522
    // Predicated region
    $region14: #{tpu_custom_call.1} parent=1 // pred_check
      _
    $region15: #{tpu_custom_call.1} parent=1 // pred_check_branch
      %526 = sbr.rel (0) target = $region17
    $region16: #{tpu_custom_call.1} parent=1 // pred_region
      %s528 = ssub.s32 32, 32
      %529 = vsyncadd [#allocation3], %s528
      %s531 = sshll.u32 [#allocation2], 4
      %s532 = int_to_ptr.vmem [resolvable:$true] %s531
      %534 = dma.vmem_to_hbm [thread:$0]  %s532, 32, %s3, [#allocation3]
    $region17: #{tpu_custom_call.1} parent=1 // pred_fallthru
      _
    // Predicated region
    $region18: #{tpu_custom_call.1} parent=1 // pred_check
      _
    $region19: #{tpu_custom_call.1} parent=1 // pred_check_branch
      %536 = sbr.rel (0) target = $region21
    $region20: #{tpu_custom_call.1} parent=1 // pred_region
      %537 = dma.done [#allocation3], 32
    $region21: #{tpu_custom_call.1} parent=1 // pred_fallthru
      _
    %538 = vsyncpa [#allocation3], 1

</llo_original>
